<compile_context>
chip_gen: v7x
topology: tpu7x:2x2x1
jax: 0.10.0
libtpu: 0.0.40
codegen_flags: <defaults>
</compile_context>

<pallas_src>
import jax
import jax.numpy as jnp
from jax.experimental import pallas as pl
from jax.experimental.pallas import tpu as pltpu

_LANE = 128


def _round_up(x, m):
    return ((x + m - 1) // m) * m


def _pad2d(a, rows, cols, dtype):
    """Zero-pad a 2-D array up to (rows, cols) and cast to dtype."""
    r, c = a.shape
    return jnp.pad(a.astype(dtype), ((0, rows - r), (0, cols - c)))


def _backbone_mlp_kernel(x_ref, w1_ref, b1_ref, w2_ref, b2_ref, w3_ref, b3_ref,
                         out_ref):
    """Fused 3-layer MLP: relu(relu(x@W1+b1)@W2+b2)@W3+b3 on one batch tile."""
    x = x_ref[...]  # bf16, fed straight to the MXU

    h1 = jnp.dot(x, w1_ref[...], preferred_element_type=jnp.float32)
    h1 = jnp.maximum(h1 + b1_ref[...], 0.0)            # f32 bias + ReLU (VPU)

    h2 = jnp.dot(h1.astype(jnp.bfloat16), w2_ref[...],
                 preferred_element_type=jnp.float32)
    h2 = jnp.maximum(h2 + b2_ref[...], 0.0)

    logits = jnp.dot(h2.astype(jnp.bfloat16), w3_ref[...],
                     preferred_element_type=jnp.float32)
    out_ref[...] = (logits + b3_ref[...]).astype(out_ref.dtype)


def continual_model_forward(x_nchw, params):
    """ContinualModel.forward with np_type disabled: returns self.net(x).

    x_nchw: [B, C, H, W] float32 (PyTorch NCHW layout).
    params: dict of w1,b1,w2,b2,w3,b3 (f32, un-padded logical shapes).
    Returns logits [B, num_classes] in float32.
    """
    B = x_nchw.shape[0]
    x_flat = x_nchw.reshape(B, -1)  # glue: flatten NCHW -> (B, C*H*W)

    w1, b1 = params["w1"], params["b1"]
    w2, b2 = params["w2"], params["b2"]
    w3, b3 = params["w3"], params["b3"]

    D_in = w1.shape[0]
    H = w1.shape[1]
    C_out = w3.shape[1]
    assert x_flat.shape == (B, D_in)

    # --- padding to lane / sublane / MXU granules --------------------------
    D_pad = _round_up(D_in, _LANE)
    H_pad = _round_up(H, _LANE)
    C_pad = _round_up(C_out, _LANE)

    # Batch tile: at least 16 rows (bf16 sublane packing), at most 256
    # (MXU M granule).  Batch is zero-padded to a multiple of TM.
    TM = min(256, _round_up(max(B, 1), 16))
    B_pad = _round_up(B, TM)

    # Zero-pad + cast operands (padded hidden columns have zero weight & bias,
    # so ReLU(0)=0 and they contribute nothing downstream; padded input
    # columns hit zero weight rows).
    x_p = _pad2d(x_flat, B_pad, D_pad, jnp.bfloat16)
    w1_p = _pad2d(w1, D_pad, H_pad, jnp.bfloat16)
    b1_p = _pad2d(b1, 1, H_pad, jnp.float32)
    w2_p = _pad2d(w2, H_pad, H_pad, jnp.bfloat16)
    b2_p = _pad2d(b2, 1, H_pad, jnp.float32)
    w3_p = _pad2d(w3, H_pad, C_pad, jnp.bfloat16)
    b3_p = _pad2d(b3, 1, C_pad, jnp.float32)

    grid = (B_pad // TM,)

    flops = 2 * B_pad * (D_pad * H_pad + H_pad * H_pad + H_pad * C_pad)
    bytes_accessed = (
        x_p.size * 2 + w1_p.size * 2 + w2_p.size * 2 + w3_p.size * 2
        + b1_p.size * 4 + b2_p.size * 4 + b3_p.size * 4
        + B_pad * C_pad * 4)

    out = pl.pallas_call(
        _backbone_mlp_kernel,
        out_shape=jax.ShapeDtypeStruct((B_pad, C_pad), jnp.float32),
        grid_spec=pltpu.PrefetchScalarGridSpec(
            num_scalar_prefetch=0,
            grid=grid,
            in_specs=[
                pl.BlockSpec((TM, D_pad), lambda i: (i, 0)),      # x tile
                pl.BlockSpec((D_pad, H_pad), lambda i: (0, 0)),   # w1 (resident)
                pl.BlockSpec((1, H_pad), lambda i: (0, 0)),       # b1
                pl.BlockSpec((H_pad, H_pad), lambda i: (0, 0)),   # w2
                pl.BlockSpec((1, H_pad), lambda i: (0, 0)),       # b2
                pl.BlockSpec((H_pad, C_pad), lambda i: (0, 0)),   # w3
                pl.BlockSpec((1, C_pad), lambda i: (0, 0)),       # b3
            ],
            out_specs=pl.BlockSpec((TM, C_pad), lambda i: (i, 0)),
        ),
        compiler_params=pltpu.CompilerParams(
            dimension_semantics=("parallel",)),
        cost_estimate=pl.CostEstimate(
            flops=flops, transcendentals=0, bytes_accessed=bytes_accessed),
    )(x_p, w1_p, b1_p, w2_p, b2_p, w3_p, b3_p)

    # Slice away batch / class padding.
    return out[:B, :C_out]


def init_params(key, d_in, hidden, n_classes):
    """Deterministic PyTorch-Linear-style init: U(-1/sqrt(fan_in), 1/sqrt(fan_in))."""
    ks = jax.random.split(key, 6)

    def lin(kw, kb, fan_in, fan_out):
        bound = 1.0 / jnp.sqrt(jnp.float32(fan_in))
        w = jax.random.uniform(kw, (fan_in, fan_out), jnp.float32, -bound, bound)
        b = jax.random.uniform(kb, (1, fan_out), jnp.float32, -bound, bound)
        return w, b

    w1, b1 = lin(ks[0], ks[1], d_in, hidden)
    w2, b2 = lin(ks[2], ks[3], hidden, hidden)
    w3, b3 = lin(ks[4], ks[5], hidden, n_classes)
    return {"w1": w1, "b1": b1, "w2": w2, "b2": b2, "w3": w3, "b3": b3}


if __name__ == "__main__":
    key = jax.random.PRNGKey(0)
    k_x, k_p = jax.random.split(key)

    # Small shapes consistent with the module's forward: a batch of images.
    B, C, Himg, Wimg = 2, 4, 16, 16
    hidden = 32
    n_classes = 10
    d_in = C * Himg * Wimg

    x = jax.random.normal(k_x, (B, C, Himg, Wimg), jnp.float32)  # NCHW
    params = init_params(k_p, d_in, hidden, n_classes)

    fwd = jax.jit(continual_model_forward)
    out = fwd(x, params)
    out = jax.block_until_ready(out)
    assert out.shape == (B, n_classes)

    # Reference 1: precision-matched (bf16 operands, f32 accumulate) pure JAX.
    xf = x.reshape(B, -1).astype(jnp.bfloat16)
    w1b = params["w1"].astype(jnp.bfloat16)
    w2b = params["w2"].astype(jnp.bfloat16)
    w3b = params["w3"].astype(jnp.bfloat16)
    h1 = jnp.maximum(
        jnp.dot(xf, w1b, preferred_element_type=jnp.float32) + params["b1"], 0.0)
    h2 = jnp.maximum(
        jnp.dot(h1.astype(jnp.bfloat16), w2b,
                preferred_element_type=jnp.float32) + params["b2"], 0.0)
    ref_bf16 = jnp.dot(h2.astype(jnp.bfloat16), w3b,
                       preferred_element_type=jnp.float32) + params["b3"]
    assert jnp.allclose(out, ref_bf16, atol=1e-2, rtol=1e-2)

    # Reference 2: full-f32 forward (looser tolerance — bf16 operand rounding).
    xf32 = x.reshape(B, -1)
    h1f = jnp.maximum(xf32 @ params["w1"] + params["b1"], 0.0)
    h2f = jnp.maximum(h1f @ params["w2"] + params["b2"], 0.0)
    ref_f32 = h2f @ params["w3"] + params["b3"]
    assert jnp.allclose(out, ref_f32, atol=5e-2, rtol=5e-2)

    print("KERNEL_OK")
</pallas_src>

<mosaic_0001>
module attributes {stable_mosaic.version = 11 : i64} {
  func.func @_backbone_mlp_kernel(%arg0: i32, %arg1: memref<16x1024xbf16, #tpu.memory_space<vmem>>, %arg2: memref<1024x128xbf16, #tpu.memory_space<vmem>>, %arg3: memref<1x128xf32, #tpu.memory_space<vmem>>, %arg4: memref<128x128xbf16, #tpu.memory_space<vmem>>, %arg5: memref<1x128xf32, #tpu.memory_space<vmem>>, %arg6: memref<128x128xbf16, #tpu.memory_space<vmem>>, %arg7: memref<1x128xf32, #tpu.memory_space<vmem>>, %arg8: memref<16x128xf32, #tpu.memory_space<vmem>>) attributes {dimension_semantics = [#tpu.dimension_semantics<parallel>], iteration_bounds = array<i64: 1>, scalar_prefetch = 0 : i64, scratch_operands = 0 : i64, tpu.core_type = #tpu.core_type<tc>, window_params = [{transform_indices = @transform_0, window_bounds = array<i64: 16, 1024>}, {pipeline_mode = #tpu.pipeline_mode<synchronous>, transform_indices = @transform_1, window_bounds = array<i64: 1024, 128>}, {pipeline_mode = #tpu.pipeline_mode<synchronous>, transform_indices = @transform_2, window_bounds = array<i64: 1, 128>}, {pipeline_mode = #tpu.pipeline_mode<synchronous>, transform_indices = @transform_3, window_bounds = array<i64: 128, 128>}, {pipeline_mode = #tpu.pipeline_mode<synchronous>, transform_indices = @transform_4, window_bounds = array<i64: 1, 128>}, {pipeline_mode = #tpu.pipeline_mode<synchronous>, transform_indices = @transform_5, window_bounds = array<i64: 128, 128>}, {pipeline_mode = #tpu.pipeline_mode<synchronous>, transform_indices = @transform_6, window_bounds = array<i64: 1, 128>}, {transform_indices = @transform_7, window_bounds = array<i64: 16, 128>}]} {
    %c0 = arith.constant 0 : index
    %c0_0 = arith.constant 0 : index
    %0 = vector.load %arg1[%c0, %c0_0] : memref<16x1024xbf16, #tpu.memory_space<vmem>>, vector<16x1024xbf16>
    %c0_1 = arith.constant 0 : index
    %c0_2 = arith.constant 0 : index
    %1 = vector.load %arg2[%c0_1, %c0_2] : memref<1024x128xbf16, #tpu.memory_space<vmem>>, vector<1024x128xbf16>
    %cst = arith.constant dense<0.000000e+00> : vector<16x128xf32>
    %2 = tpu.matmul %0, %1, %cst {dimension_numbers = #tpu.dot_dimension_numbers<[1], [0], [0], [1], [0, 0, 1, 1], [], []>} : vector<16x1024xbf16>, vector<1024x128xbf16>, vector<16x128xf32> -> vector<16x128xf32>
    %c0_3 = arith.constant 0 : index
    %c0_4 = arith.constant 0 : index
    %3 = vector.load %arg3[%c0_3, %c0_4] : memref<1x128xf32, #tpu.memory_space<vmem>>, vector<1x128xf32>
    %4 = vector.broadcast %3 : vector<1x128xf32> to vector<16x128xf32>
    %5 = arith.addf %2, %4 : vector<16x128xf32>
    %cst_5 = arith.constant 0.000000e+00 : f32
    %6 = vector.broadcast %cst_5 : f32 to vector<16x128xf32>
    %7 = arith.maximumf %5, %6 : vector<16x128xf32>
    %8 = arith.truncf %7 : vector<16x128xf32> to vector<16x128xbf16>
    %c0_6 = arith.constant 0 : index
    %c0_7 = arith.constant 0 : index
    %9 = vector.load %arg4[%c0_6, %c0_7] : memref<128x128xbf16, #tpu.memory_space<vmem>>, vector<128x128xbf16>
    %cst_8 = arith.constant dense<0.000000e+00> : vector<16x128xf32>
    %10 = tpu.matmul %8, %9, %cst_8 {dimension_numbers = #tpu.dot_dimension_numbers<[1], [0], [0], [1], [0, 0, 1, 1], [], []>} : vector<16x128xbf16>, vector<128x128xbf16>, vector<16x128xf32> -> vector<16x128xf32>
    %c0_9 = arith.constant 0 : index
    %c0_10 = arith.constant 0 : index
    %11 = vector.load %arg5[%c0_9, %c0_10] : memref<1x128xf32, #tpu.memory_space<vmem>>, vector<1x128xf32>
    %12 = vector.broadcast %11 : vector<1x128xf32> to vector<16x128xf32>
    %13 = arith.addf %10, %12 : vector<16x128xf32>
    %cst_11 = arith.constant 0.000000e+00 : f32
    %14 = vector.broadcast %cst_11 : f32 to vector<16x128xf32>
    %15 = arith.maximumf %13, %14 : vector<16x128xf32>
    %16 = arith.truncf %15 : vector<16x128xf32> to vector<16x128xbf16>
    %c0_12 = arith.constant 0 : index
    %c0_13 = arith.constant 0 : index
    %17 = vector.load %arg6[%c0_12, %c0_13] : memref<128x128xbf16, #tpu.memory_space<vmem>>, vector<128x128xbf16>
    %cst_14 = arith.constant dense<0.000000e+00> : vector<16x128xf32>
    %18 = tpu.matmul %16, %17, %cst_14 {dimension_numbers = #tpu.dot_dimension_numbers<[1], [0], [0], [1], [0, 0, 1, 1], [], []>} : vector<16x128xbf16>, vector<128x128xbf16>, vector<16x128xf32> -> vector<16x128xf32>
    %c0_15 = arith.constant 0 : index
    %c0_16 = arith.constant 0 : index
    %19 = vector.load %arg7[%c0_15, %c0_16] : memref<1x128xf32, #tpu.memory_space<vmem>>, vector<1x128xf32>
    %20 = vector.broadcast %19 : vector<1x128xf32> to vector<16x128xf32>
    %21 = arith.addf %18, %20 : vector<16x128xf32>
    %c0_17 = arith.constant 0 : index
    %c0_18 = arith.constant 0 : index
    %22 = vector.load %arg8[%c0_17, %c0_18] : memref<16x128xf32, #tpu.memory_space<vmem>>, vector<16x128xf32>
    tpu.vector_store %arg8[%c0_17, %c0_18], %21 {strides = array<i32>} : memref<16x128xf32, #tpu.memory_space<vmem>>, vector<16x128xf32>,
    return
  }
  func.func @transform_0(%arg0: i32) -> (i32, i32) {
    %c0_i32 = arith.constant 0 : i32
    %c0_i32_0 = arith.constant 0 : i32
    return %arg0, %c0_i32 : i32, i32
  }
  func.func @transform_1(%arg0: i32) -> (i32, i32) {
    %c0_i32 = arith.constant 0 : i32
    %c0_i32_0 = arith.constant 0 : i32
    %c0_i32_1 = arith.constant 0 : i32
    return %c0_i32, %c0_i32_0 : i32, i32
  }
  func.func @transform_2(%arg0: i32) -> (i32, i32) {
    %c0_i32 = arith.constant 0 : i32
    %c0_i32_0 = arith.constant 0 : i32
    %c0_i32_1 = arith.constant 0 : i32
    return %c0_i32, %c0_i32_0 : i32, i32
  }
  func.func @transform_3(%arg0: i32) -> (i32, i32) {
    %c0_i32 = arith.constant 0 : i32
    %c0_i32_0 = arith.constant 0 : i32
    %c0_i32_1 = arith.constant 0 : i32
    return %c0_i32, %c0_i32_0 : i32, i32
  }
  func.func @transform_4(%arg0: i32) -> (i32, i32) {
    %c0_i32 = arith.constant 0 : i32
    %c0_i32_0 = arith.constant 0 : i32
    %c0_i32_1 = arith.constant 0 : i32
    return %c0_i32, %c0_i32_0 : i32, i32
  }
  func.func @transform_5(%arg0: i32) -> (i32, i32) {
    %c0_i32 = arith.constant 0 : i32
    %c0_i32_0 = arith.constant 0 : i32
    %c0_i32_1 = arith.constant 0 : i32
    return %c0_i32, %c0_i32_0 : i32, i32
  }
  func.func @transform_6(%arg0: i32) -> (i32, i32) {
    %c0_i32 = arith.constant 0 : i32
    %c0_i32_0 = arith.constant 0 : i32
    %c0_i32_1 = arith.constant 0 : i32
    return %c0_i32, %c0_i32_0 : i32, i32
  }
  func.func @transform_7(%arg0: i32) -> (i32, i32) {
    %c0_i32 = arith.constant 0 : i32
    %c0_i32_0 = arith.constant 0 : i32
    return %arg0, %c0_i32 : i32, i32
  }
}

</mosaic_0001>

<llo_original>
// kernel: continual_model_forward.1
$region0: #{continual_model_forward.1}
  #allocation0 [shape = 'u32[]', space=smem, size = 0x4, offset = 0x4, fixed_abs, tag = 'smem constant byte address 0x4 - core index']
  #allocation1 [shape = 'u32[144,128]{1,0:T(1,128)}', space=vmem, size = 0x12000, scoped, tag = 'internal scratch']
  %s0 = inlined_call_operand.vmem [shape: bf16[16,1024], index: 0, kind: input, shape index: {}]
  %s1 = inlined_call_operand.vmem [shape: bf16[1024,128], index: 1, kind: input, shape index: {}]
  %s2 = inlined_call_operand.vmem [shape: f32[1,128], index: 2, kind: input, shape index: {}]
  %s3 = inlined_call_operand.vmem [shape: bf16[128,128], index: 3, kind: input, shape index: {}]
  %s4 = inlined_call_operand.vmem [shape: f32[1,128], index: 4, kind: input, shape index: {}]
  %s5 = inlined_call_operand.vmem [shape: bf16[128,128], index: 5, kind: input, shape index: {}]
  %s6 = inlined_call_operand.vmem [shape: f32[1,128], index: 6, kind: input, shape index: {}]
  %s7 = inlined_call_operand.vmem [shape: f32[16,128], index: 7, kind: output, shape index: {}]
  %s8 = sld [smem:[#allocation0]]
  $region38: #{continual_model_forward.1} parent=0
    _
  %s10 = ssub.s32 1, %s8
  %s11 = scalar_select 0, %s10, %s8
  // Predicated region
  $region2: #{continual_model_forward.1} parent=0 // pred_check
    _
  $region3: #{continual_model_forward.1} parent=0 // pred_check_branch
    %13 = sbr.rel (0) target = $region5
  $region4: #{continual_model_forward.1} parent=0 // pred_region
    _
  $region5: #{continual_model_forward.1} parent=0 // pred_fallthru
    _
  // Predicated region
  $region6: #{continual_model_forward.1} parent=0 // pred_check
    _
  $region7: #{continual_model_forward.1} parent=0 // pred_check_branch
    %15 = sbr.rel (0) target = $region9
  $region8: #{continual_model_forward.1} parent=0 // pred_region
    _
  $region9: #{continual_model_forward.1} parent=0 // pred_fallthru
    _
  // Predicated region
  $region10: #{continual_model_forward.1} parent=0 // pred_check
    _
  $region11: #{continual_model_forward.1} parent=0 // pred_check_branch
    %17 = sbr.rel (0) target = $region13
  $region12: #{continual_model_forward.1} parent=0 // pred_region
    _
  $region13: #{continual_model_forward.1} parent=0 // pred_fallthru
    _
  // Predicated region
  $region14: #{continual_model_forward.1} parent=0 // pred_check
    _
  $region15: #{continual_model_forward.1} parent=0 // pred_check_branch
    %19 = sbr.rel (0) target = $region17
  $region16: #{continual_model_forward.1} parent=0 // pred_region
    _
  $region17: #{continual_model_forward.1} parent=0 // pred_fallthru
    _
  // Predicated region
  $region18: #{continual_model_forward.1} parent=0 // pred_check
    _
  $region19: #{continual_model_forward.1} parent=0 // pred_check_branch
    %21 = sbr.rel (0) target = $region21
  $region20: #{continual_model_forward.1} parent=0 // pred_region
    _
  $region21: #{continual_model_forward.1} parent=0 // pred_fallthru
    _
  // Predicated region
  $region22: #{continual_model_forward.1} parent=0 // pred_check
    _
  $region23: #{continual_model_forward.1} parent=0 // pred_check_branch
    %23 = sbr.rel (0) target = $region25
  $region24: #{continual_model_forward.1} parent=0 // pred_region
    _
  $region25: #{continual_model_forward.1} parent=0 // pred_fallthru
    _
  // Predicated region
  $region26: #{continual_model_forward.1} parent=0 // pred_check
    _
  $region27: #{continual_model_forward.1} parent=0 // pred_check_branch
    %25 = sbr.rel (0) target = $region29
  $region28: #{continual_model_forward.1} parent=0 // pred_region
    _
  $region29: #{continual_model_forward.1} parent=0 // pred_fallthru
    _
  %v27 = vld [vmem:[%s0] sm:$0xff]
  %v28 = vld [vmem:[%s0 + $0x8] sm:$0xff]
  %v29 = vld [vmem:[%s0 + $0x10] sm:$0xff]
  %v30 = vld [vmem:[%s0 + $0x18] sm:$0xff]
  %v31 = vld [vmem:[%s0 + $0x20] sm:$0xff]
  %v32 = vld [vmem:[%s0 + $0x28] sm:$0xff]
  %v33 = vld [vmem:[%s0 + $0x30] sm:$0xff]
  %v34 = vld [vmem:[%s0 + $0x38] sm:$0xff]
  %v35 = vld [vmem:[%s1] sm:$0xf]
  %v36 = vld [vmem:[%s1 + $0x4] sm:$0xf]
  %v37 = vld [vmem:[%s1 + $0x8] sm:$0xf]
  %v38 = vld [vmem:[%s1 + $0xc] sm:$0xf]
  %v39 = vld [vmem:[%s1 + $0x10] sm:$0xf]
  %v40 = vld [vmem:[%s1 + $0x14] sm:$0xf]
  %v41 = vld [vmem:[%s1 + $0x18] sm:$0xf]
  %v42 = vld [vmem:[%s1 + $0x1c] sm:$0xf]
  %v43 = vld [vmem:[%s1 + $0x20] sm:$0xf]
  %v44 = vld [vmem:[%s1 + $0x24] sm:$0xf]
  %v45 = vld [vmem:[%s1 + $0x28] sm:$0xf]
  %v46 = vld [vmem:[%s1 + $0x2c] sm:$0xf]
  %v47 = vld [vmem:[%s1 + $0x30] sm:$0xf]
  %v48 = vld [vmem:[%s1 + $0x34] sm:$0xf]
  %v49 = vld [vmem:[%s1 + $0x38] sm:$0xf]
  %v50 = vld [vmem:[%s1 + $0x3c] sm:$0xf]
  %v51 = vld [vmem:[%s1 + $0x40] sm:$0xf]
  %v52 = vld [vmem:[%s1 + $0x44] sm:$0xf]
  %v53 = vld [vmem:[%s1 + $0x48] sm:$0xf]
  %v54 = vld [vmem:[%s1 + $0x4c] sm:$0xf]
  %v55 = vld [vmem:[%s1 + $0x50] sm:$0xf]
  %v56 = vld [vmem:[%s1 + $0x54] sm:$0xf]
  %v57 = vld [vmem:[%s1 + $0x58] sm:$0xf]
  %v58 = vld [vmem:[%s1 + $0x5c] sm:$0xf]
  %v59 = vld [vmem:[%s1 + $0x60] sm:$0xf]
  %v60 = vld [vmem:[%s1 + $0x64] sm:$0xf]
  %v61 = vld [vmem:[%s1 + $0x68] sm:$0xf]
  %v62 = vld [vmem:[%s1 + $0x6c] sm:$0xf]
  %v63 = vld [vmem:[%s1 + $0x70] sm:$0xf]
  %v64 = vld [vmem:[%s1 + $0x74] sm:$0xf]
  %v65 = vld [vmem:[%s1 + $0x78] sm:$0xf]
  %v66 = vld [vmem:[%s1 + $0x7c] sm:$0xf]
  %v67 = vld [vmem:[%s1 + $0x80] sm:$0xf]
  %v68 = vld [vmem:[%s1 + $0x84] sm:$0xf]
  %v69 = vld [vmem:[%s1 + $0x88] sm:$0xf]
  %v70 = vld [vmem:[%s1 + $0x8c] sm:$0xf]
  %v71 = vld [vmem:[%s1 + $0x90] sm:$0xf]
  %v72 = vld [vmem:[%s1 + $0x94] sm:$0xf]
  %v73 = vld [vmem:[%s1 + $0x98] sm:$0xf]
  %v74 = vld [vmem:[%s1 + $0x9c] sm:$0xf]
  %v75 = vld [vmem:[%s1 + $0xa0] sm:$0xf]
  %v76 = vld [vmem:[%s1 + $0xa4] sm:$0xf]
  %v77 = vld [vmem:[%s1 + $0xa8] sm:$0xf]
  %v78 = vld [vmem:[%s1 + $0xac] sm:$0xf]
  %v79 = vld [vmem:[%s1 + $0xb0] sm:$0xf]
  %v80 = vld [vmem:[%s1 + $0xb4] sm:$0xf]
  %v81 = vld [vmem:[%s1 + $0xb8] sm:$0xf]
  %v82 = vld [vmem:[%s1 + $0xbc] sm:$0xf]
  %v83 = vld [vmem:[%s1 + $0xc0] sm:$0xf]
  %v84 = vld [vmem:[%s1 + $0xc4] sm:$0xf]
  %v85 = vld [vmem:[%s1 + $0xc8] sm:$0xf]
  %v86 = vld [vmem:[%s1 + $0xcc] sm:$0xf]
  %v87 = vld [vmem:[%s1 + $0xd0] sm:$0xf]
  %v88 = vld [vmem:[%s1 + $0xd4] sm:$0xf]
  %v89 = vld [vmem:[%s1 + $0xd8] sm:$0xf]
  %v90 = vld [vmem:[%s1 + $0xdc] sm:$0xf]
  %v91 = vld [vmem:[%s1 + $0xe0] sm:$0xf]
  %v92 = vld [vmem:[%s1 + $0xe4] sm:$0xf]
  %v93 = vld [vmem:[%s1 + $0xe8] sm:$0xf]
  %v94 = vld [vmem:[%s1 + $0xec] sm:$0xf]
  %v95 = vld [vmem:[%s1 + $0xf0] sm:$0xf]
  %v96 = vld [vmem:[%s1 + $0xf4] sm:$0xf]
  %v97 = vld [vmem:[%s1 + $0xf8] sm:$0xf]
  %v98 = vld [vmem:[%s1 + $0xfc] sm:$0xf]
  %v99 = vld [vmem:[%s1 + $0x100] sm:$0xf]
  %v100 = vld [vmem:[%s1 + $0x104] sm:$0xf]
  %v101 = vld [vmem:[%s1 + $0x108] sm:$0xf]
  %v102 = vld [vmem:[%s1 + $0x10c] sm:$0xf]
  %v103 = vld [vmem:[%s1 + $0x110] sm:$0xf]
  %v104 = vld [vmem:[%s1 + $0x114] sm:$0xf]
  %v105 = vld [vmem:[%s1 + $0x118] sm:$0xf]
  %v106 = vld [vmem:[%s1 + $0x11c] sm:$0xf]
  %v107 = vld [vmem:[%s1 + $0x120] sm:$0xf]
  %v108 = vld [vmem:[%s1 + $0x124] sm:$0xf]
  %v109 = vld [vmem:[%s1 + $0x128] sm:$0xf]
  %v110 = vld [vmem:[%s1 + $0x12c] sm:$0xf]
  %v111 = vld [vmem:[%s1 + $0x130] sm:$0xf]
  %v112 = vld [vmem:[%s1 + $0x134] sm:$0xf]
  %v113 = vld [vmem:[%s1 + $0x138] sm:$0xf]
  %v114 = vld [vmem:[%s1 + $0x13c] sm:$0xf]
  %v115 = vld [vmem:[%s1 + $0x140] sm:$0xf]
  %v116 = vld [vmem:[%s1 + $0x144] sm:$0xf]
  %v117 = vld [vmem:[%s1 + $0x148] sm:$0xf]
  %v118 = vld [vmem:[%s1 + $0x14c] sm:$0xf]
  %v119 = vld [vmem:[%s1 + $0x150] sm:$0xf]
  %v120 = vld [vmem:[%s1 + $0x154] sm:$0xf]
  %v121 = vld [vmem:[%s1 + $0x158] sm:$0xf]
  %v122 = vld [vmem:[%s1 + $0x15c] sm:$0xf]
  %v123 = vld [vmem:[%s1 + $0x160] sm:$0xf]
  %v124 = vld [vmem:[%s1 + $0x164] sm:$0xf]
  %v125 = vld [vmem:[%s1 + $0x168] sm:$0xf]
  %v126 = vld [vmem:[%s1 + $0x16c] sm:$0xf]
  %v127 = vld [vmem:[%s1 + $0x170] sm:$0xf]
  %v128 = vld [vmem:[%s1 + $0x174] sm:$0xf]
  %v129 = vld [vmem:[%s1 + $0x178] sm:$0xf]
  %v130 = vld [vmem:[%s1 + $0x17c] sm:$0xf]
  %v131 = vld [vmem:[%s1 + $0x180] sm:$0xf]
  %v132 = vld [vmem:[%s1 + $0x184] sm:$0xf]
  %v133 = vld [vmem:[%s1 + $0x188] sm:$0xf]
  %v134 = vld [vmem:[%s1 + $0x18c] sm:$0xf]
  %v135 = vld [vmem:[%s1 + $0x190] sm:$0xf]
  %v136 = vld [vmem:[%s1 + $0x194] sm:$0xf]
  %v137 = vld [vmem:[%s1 + $0x198] sm:$0xf]
  %v138 = vld [vmem:[%s1 + $0x19c] sm:$0xf]
  %v139 = vld [vmem:[%s1 + $0x1a0] sm:$0xf]
  %v140 = vld [vmem:[%s1 + $0x1a4] sm:$0xf]
  %v141 = vld [vmem:[%s1 + $0x1a8] sm:$0xf]
  %v142 = vld [vmem:[%s1 + $0x1ac] sm:$0xf]
  %v143 = vld [vmem:[%s1 + $0x1b0] sm:$0xf]
  %v144 = vld [vmem:[%s1 + $0x1b4] sm:$0xf]
  %v145 = vld [vmem:[%s1 + $0x1b8] sm:$0xf]
  %v146 = vld [vmem:[%s1 + $0x1bc] sm:$0xf]
  %v147 = vld [vmem:[%s1 + $0x1c0] sm:$0xf]
  %v148 = vld [vmem:[%s1 + $0x1c4] sm:$0xf]
  %v149 = vld [vmem:[%s1 + $0x1c8] sm:$0xf]
  %v150 = vld [vmem:[%s1 + $0x1cc] sm:$0xf]
  %v151 = vld [vmem:[%s1 + $0x1d0] sm:$0xf]
  %v152 = vld [vmem:[%s1 + $0x1d4] sm:$0xf]
  %v153 = vld [vmem:[%s1 + $0x1d8] sm:$0xf]
  %v154 = vld [vmem:[%s1 + $0x1dc] sm:$0xf]
  %v155 = vld [vmem:[%s1 + $0x1e0] sm:$0xf]
  %v156 = vld [vmem:[%s1 + $0x1e4] sm:$0xf]
  %v157 = vld [vmem:[%s1 + $0x1e8] sm:$0xf]
  %v158 = vld [vmem:[%s1 + $0x1ec] sm:$0xf]
  %v159 = vld [vmem:[%s1 + $0x1f0] sm:$0xf]
  %v160 = vld [vmem:[%s1 + $0x1f4] sm:$0xf]
  %v161 = vld [vmem:[%s1 + $0x1f8] sm:$0xf]
  %v162 = vld [vmem:[%s1 + $0x1fc] sm:$0xf]
  %v163 = vld [vmem:[%s2] sm:$0x1]
  %v165 = vlaneseq
  %v166 = vshrl.u32 %v165, 7
  %v167 = vsub.s32 0, %v166
  %v168 = vrot.slane %v163, %v167
  %v178 = vunpack.c.l.b16 %v27
  %v179 = vunpack.c.h.b16 %v27
  %v180 = vunpack.c.l.b16 %v28
  %v181 = vunpack.c.h.b16 %v28
  %v182 = vunpack.c.l.b16 %v29
  %v183 = vunpack.c.h.b16 %v29
  %v184 = vunpack.c.l.b16 %v30
  %v185 = vunpack.c.h.b16 %v30
  %v186 = vunpack.c.l.b16 %v31
  %v187 = vunpack.c.h.b16 %v31
  %v188 = vunpack.c.l.b16 %v32
  %v189 = vunpack.c.h.b16 %v32
  %v190 = vunpack.c.l.b16 %v33
  %v191 = vunpack.c.h.b16 %v33
  %v192 = vunpack.c.l.b16 %v34
  %v193 = vunpack.c.h.b16 %v34
  %v194 = vpack.c.b16 %v186, %v178
  %v195 = vpack.c.b16 %v187, %v179
  %v196 = vpack.c.b16 %v188, %v180
  %v197 = vpack.c.b16 %v189, %v181
  %v198 = vpack.c.b16 %v190, %v182
  %v199 = vpack.c.b16 %v191, %v183
  %v200 = vpack.c.b16 %v192, %v184
  %v201 = vpack.c.b16 %v193, %v185
  %v338 = vunpack.c.l.b16 %v35
  %v339 = vunpack.c.l.b16 %v36
  %v340 = vunpack.c.l.b16 %v37
  %v341 = vunpack.c.l.b16 %v38
  %v342 = vunpack.c.l.b16 %v39
  %v343 = vunpack.c.l.b16 %v40
  %v344 = vunpack.c.l.b16 %v41
  %v345 = vunpack.c.l.b16 %v42
  %v346 = vunpack.c.l.b16 %v43
  %v347 = vunpack.c.l.b16 %v44
  %v348 = vunpack.c.l.b16 %v45
  %v349 = vunpack.c.l.b16 %v46
  %v350 = vunpack.c.l.b16 %v47
  %v351 = vunpack.c.l.b16 %v48
  %v352 = vunpack.c.l.b16 %v49
  %v353 = vunpack.c.l.b16 %v50
  %v354 = vunpack.c.l.b16 %v51
  %v355 = vunpack.c.l.b16 %v52
  %v356 = vunpack.c.l.b16 %v53
  %v357 = vunpack.c.l.b16 %v54
  %v358 = vunpack.c.l.b16 %v55
  %v359 = vunpack.c.l.b16 %v56
  %v360 = vunpack.c.l.b16 %v57
  %v361 = vunpack.c.l.b16 %v58
  %v362 = vunpack.c.l.b16 %v59
  %v363 = vunpack.c.l.b16 %v60
  %v364 = vunpack.c.l.b16 %v61
  %v365 = vunpack.c.l.b16 %v62
  %v366 = vunpack.c.l.b16 %v63
  %v367 = vunpack.c.l.b16 %v64
  %v368 = vunpack.c.l.b16 %v65
  %v369 = vunpack.c.l.b16 %v66
  %v370 = vunpack.c.l.b16 %v67
  %v371 = vunpack.c.l.b16 %v68
  %v372 = vunpack.c.l.b16 %v69
  %v373 = vunpack.c.l.b16 %v70
  %v374 = vunpack.c.l.b16 %v71
  %v375 = vunpack.c.l.b16 %v72
  %v376 = vunpack.c.l.b16 %v73
  %v377 = vunpack.c.l.b16 %v74
  %v378 = vunpack.c.l.b16 %v75
  %v379 = vunpack.c.l.b16 %v76
  %v380 = vunpack.c.l.b16 %v77
  %v381 = vunpack.c.l.b16 %v78
  %v382 = vunpack.c.l.b16 %v79
  %v383 = vunpack.c.l.b16 %v80
  %v384 = vunpack.c.l.b16 %v81
  %v385 = vunpack.c.l.b16 %v82
  %v386 = vunpack.c.l.b16 %v83
  %v387 = vunpack.c.l.b16 %v84
  %v388 = vunpack.c.l.b16 %v85
  %v389 = vunpack.c.l.b16 %v86
  %v390 = vunpack.c.l.b16 %v87
  %v391 = vunpack.c.l.b16 %v88
  %v392 = vunpack.c.l.b16 %v89
  %v393 = vunpack.c.l.b16 %v90
  %v394 = vunpack.c.l.b16 %v91
  %v395 = vunpack.c.l.b16 %v92
  %v396 = vunpack.c.l.b16 %v93
  %v397 = vunpack.c.l.b16 %v94
  %v398 = vunpack.c.l.b16 %v95
  %v399 = vunpack.c.l.b16 %v96
  %v400 = vunpack.c.l.b16 %v97
  %v401 = vunpack.c.l.b16 %v98
  %v402 = vunpack.c.l.b16 %v99
  %v403 = vunpack.c.l.b16 %v100
  %v404 = vunpack.c.l.b16 %v101
  %v405 = vunpack.c.l.b16 %v102
  %v406 = vunpack.c.l.b16 %v103
  %v407 = vunpack.c.l.b16 %v104
  %v408 = vunpack.c.l.b16 %v105
  %v409 = vunpack.c.l.b16 %v106
  %v410 = vunpack.c.l.b16 %v107
  %v411 = vunpack.c.l.b16 %v108
  %v412 = vunpack.c.l.b16 %v109
  %v413 = vunpack.c.l.b16 %v110
  %v414 = vunpack.c.l.b16 %v111
  %v415 = vunpack.c.l.b16 %v112
  %v416 = vunpack.c.l.b16 %v113
  %v417 = vunpack.c.l.b16 %v114
  %v418 = vunpack.c.l.b16 %v115
  %v419 = vunpack.c.l.b16 %v116
  %v420 = vunpack.c.l.b16 %v117
  %v421 = vunpack.c.l.b16 %v118
  %v422 = vunpack.c.l.b16 %v119
  %v423 = vunpack.c.l.b16 %v120
  %v424 = vunpack.c.l.b16 %v121
  %v425 = vunpack.c.l.b16 %v122
  %v426 = vunpack.c.l.b16 %v123
  %v427 = vunpack.c.l.b16 %v124
  %v428 = vunpack.c.l.b16 %v125
  %v429 = vunpack.c.l.b16 %v126
  %v430 = vunpack.c.l.b16 %v127
  %v431 = vunpack.c.l.b16 %v128
  %v432 = vunpack.c.l.b16 %v129
  %v433 = vunpack.c.l.b16 %v130
  %v434 = vunpack.c.l.b16 %v131
  %v435 = vunpack.c.l.b16 %v132
  %v436 = vunpack.c.l.b16 %v133
  %v437 = vunpack.c.l.b16 %v134
  %v438 = vunpack.c.l.b16 %v135
  %v439 = vunpack.c.l.b16 %v136
  %v440 = vunpack.c.l.b16 %v137
  %v441 = vunpack.c.l.b16 %v138
  %v442 = vunpack.c.l.b16 %v139
  %v443 = vunpack.c.l.b16 %v140
  %v444 = vunpack.c.l.b16 %v141
  %v445 = vunpack.c.l.b16 %v142
  %v446 = vunpack.c.l.b16 %v143
  %v447 = vunpack.c.l.b16 %v144
  %v448 = vunpack.c.l.b16 %v145
  %v449 = vunpack.c.l.b16 %v146
  %v450 = vunpack.c.l.b16 %v147
  %v451 = vunpack.c.l.b16 %v148
  %v452 = vunpack.c.l.b16 %v149
  %v453 = vunpack.c.l.b16 %v150
  %v454 = vunpack.c.l.b16 %v151
  %v455 = vunpack.c.l.b16 %v152
  %v456 = vunpack.c.l.b16 %v153
  %v457 = vunpack.c.l.b16 %v154
  %v458 = vunpack.c.l.b16 %v155
  %v459 = vunpack.c.l.b16 %v156
  %v460 = vunpack.c.l.b16 %v157
  %v461 = vunpack.c.l.b16 %v158
  %v462 = vunpack.c.l.b16 %v159
  %v463 = vunpack.c.l.b16 %v160
  %v464 = vunpack.c.l.b16 %v161
  %v465 = vunpack.c.l.b16 %v162
  %v466 = vpack.c.b16 %v339, %v338
  %v467 = vpack.c.b16 %v341, %v340
  %v468 = vpack.c.b16 %v343, %v342
  %v469 = vpack.c.b16 %v345, %v344
  %v470 = vpack.c.b16 %v347, %v346
  %v471 = vpack.c.b16 %v349, %v348
  %v472 = vpack.c.b16 %v351, %v350
  %v473 = vpack.c.b16 %v353, %v352
  %v474 = vpack.c.b16 %v355, %v354
  %v475 = vpack.c.b16 %v357, %v356
  %v476 = vpack.c.b16 %v359, %v358
  %v477 = vpack.c.b16 %v361, %v360
  %v478 = vpack.c.b16 %v363, %v362
  %v479 = vpack.c.b16 %v365, %v364
  %v480 = vpack.c.b16 %v367, %v366
  %v481 = vpack.c.b16 %v369, %v368
  %v482 = vpack.c.b16 %v371, %v370
  %v483 = vpack.c.b16 %v373, %v372
  %v484 = vpack.c.b16 %v375, %v374
  %v485 = vpack.c.b16 %v377, %v376
  %v486 = vpack.c.b16 %v379, %v378
  %v487 = vpack.c.b16 %v381, %v380
  %v488 = vpack.c.b16 %v383, %v382
  %v489 = vpack.c.b16 %v385, %v384
  %v490 = vpack.c.b16 %v387, %v386
  %v491 = vpack.c.b16 %v389, %v388
  %v492 = vpack.c.b16 %v391, %v390
  %v493 = vpack.c.b16 %v393, %v392
  %v494 = vpack.c.b16 %v395, %v394
  %v495 = vpack.c.b16 %v397, %v396
  %v496 = vpack.c.b16 %v399, %v398
  %v497 = vpack.c.b16 %v401, %v400
  %v498 = vpack.c.b16 %v403, %v402
  %v499 = vpack.c.b16 %v405, %v404
  %v500 = vpack.c.b16 %v407, %v406
  %v501 = vpack.c.b16 %v409, %v408
  %v502 = vpack.c.b16 %v411, %v410
  %v503 = vpack.c.b16 %v413, %v412
  %v504 = vpack.c.b16 %v415, %v414
  %v505 = vpack.c.b16 %v417, %v416
  %v506 = vpack.c.b16 %v419, %v418
  %v507 = vpack.c.b16 %v421, %v420
  %v508 = vpack.c.b16 %v423, %v422
  %v509 = vpack.c.b16 %v425, %v424
  %v510 = vpack.c.b16 %v427, %v426
  %v511 = vpack.c.b16 %v429, %v428
  %v512 = vpack.c.b16 %v431, %v430
  %v513 = vpack.c.b16 %v433, %v432
  %v514 = vpack.c.b16 %v435, %v434
  %v515 = vpack.c.b16 %v437, %v436
  %v516 = vpack.c.b16 %v439, %v438
  %v517 = vpack.c.b16 %v441, %v440
  %v518 = vpack.c.b16 %v443, %v442
  %v519 = vpack.c.b16 %v445, %v444
  %v520 = vpack.c.b16 %v447, %v446
  %v521 = vpack.c.b16 %v449, %v448
  %v522 = vpack.c.b16 %v451, %v450
  %v523 = vpack.c.b16 %v453, %v452
  %v524 = vpack.c.b16 %v455, %v454
  %v525 = vpack.c.b16 %v457, %v456
  %v526 = vpack.c.b16 %v459, %v458
  %v527 = vpack.c.b16 %v461, %v460
  %v528 = vpack.c.b16 %v463, %v462
  %v529 = vpack.c.b16 %v465, %v464
  %594 = vmatprep.subr.bf16.mxu0 0
  %595 = vmatpush1.bf16.msra.mxu0 %v466
  %596 = vmatprep.subr.bf16.mxu0 0
  %597 = vmatpush1.bf16.msra.mxu0 %v467
  %598 = vmatprep.subr.bf16.mxu0 0
  %599 = vmatpush1.bf16.msra.mxu0 %v468
  %600 = vmatprep.subr.bf16.mxu0 0
  %601 = vmatpush1.bf16.msra.mxu0 %v469
  %602 = vmatprep.subr.bf16.mxu0 0
  %603 = vmatpush1.bf16.msra.mxu0 %v470
  %604 = vmatprep.subr.bf16.mxu0 0
  %605 = vmatpush1.bf16.msra.mxu0 %v471
  %606 = vmatprep.subr.bf16.mxu0 0
  %607 = vmatpush1.bf16.msra.mxu0 %v472
  %608 = vmatprep.subr.bf16.mxu0 0
  %609 = vmatpush1.bf16.msra.mxu0 %v473
  %610 = vmatprep.subr.bf16.mxu0 0
  %611 = vmatpush1.bf16.msra.mxu0 %v474
  %612 = vmatprep.subr.bf16.mxu0 0
  %613 = vmatpush1.bf16.msra.mxu0 %v475
  %614 = vmatprep.subr.bf16.mxu0 0
  %615 = vmatpush1.bf16.msra.mxu0 %v476
  %616 = vmatprep.subr.bf16.mxu0 0
  %617 = vmatpush1.bf16.msra.mxu0 %v477
  %618 = vmatprep.subr.bf16.mxu0 0
  %619 = vmatpush1.bf16.msra.mxu0 %v478
  %620 = vmatprep.subr.bf16.mxu0 0
  %621 = vmatpush1.bf16.msra.mxu0 %v479
  %622 = vmatprep.subr.bf16.mxu0 0
  %623 = vmatpush1.bf16.msra.mxu0 %v480
  %624 = vmatprep.subr.bf16.mxu0 0
  %625 = vmatpush1.bf16.msra.mxu0 %v481
  %626 = vmatprep.mubr.bf16.mxu0 %v195
  %627 = vmatmul.mubr.bf16.gmra.mrb[0].mxu0 %v194
  %v628 = vpop.f32.mrb[0].mxu0
  %v629 = vadd.f32 %v168, %v628
  %v630 = vpop.f32.mrb[0].mxu0
  %v631 = vpop.f32.mrb[0].mxu0
  %v632 = vadd.f32 %v168, %v631
  %v633 = vpop.f32.mrb[0].mxu0
  %634 = vdwg.mxu0
  %635 = vmatprep.subr.bf16.mxu0 0
  %636 = vmatpush1.bf16.msra.mxu0 %v482
  %637 = vmatprep.subr.bf16.mxu0 0
  %638 = vmatpush1.bf16.msra.mxu0 %v483
  %639 = vmatprep.subr.bf16.mxu0 0
  %640 = vmatpush1.bf16.msra.mxu0 %v484
  %641 = vmatprep.subr.bf16.mxu0 0
  %642 = vmatpush1.bf16.msra.mxu0 %v485
  %643 = vmatprep.subr.bf16.mxu0 0
  %644 = vmatpush1.bf16.msra.mxu0 %v486
  %645 = vmatprep.subr.bf16.mxu0 0
  %646 = vmatpush1.bf16.msra.mxu0 %v487
  %647 = vmatprep.subr.bf16.mxu0 0
  %648 = vmatpush1.bf16.msra.mxu0 %v488
  %649 = vmatprep.subr.bf16.mxu0 0
  %650 = vmatpush1.bf16.msra.mxu0 %v489
  %651 = vmatprep.subr.bf16.mxu0 0
  %652 = vmatpush1.bf16.msra.mxu0 %v490
  %653 = vmatprep.subr.bf16.mxu0 0
  %654 = vmatpush1.bf16.msra.mxu0 %v491
  %655 = vmatprep.subr.bf16.mxu0 0
  %656 = vmatpush1.bf16.msra.mxu0 %v492
  %657 = vmatprep.subr.bf16.mxu0 0
  %658 = vmatpush1.bf16.msra.mxu0 %v493
  %659 = vmatprep.subr.bf16.mxu0 0
  %660 = vmatpush1.bf16.msra.mxu0 %v494
  %661 = vmatprep.subr.bf16.mxu0 0
  %662 = vmatpush1.bf16.msra.mxu0 %v495
  %663 = vmatprep.subr.bf16.mxu0 0
  %664 = vmatpush1.bf16.msra.mxu0 %v496
  %665 = vmatprep.subr.bf16.mxu0 0
  %666 = vmatpush1.bf16.msra.mxu0 %v497
  %667 = vmatprep.mubr.bf16.mxu0 %v197
  %668 = vmatmul.mubr.bf16.gmra.mrb[0].mxu0 %v196
  %v669 = vpop.f32.mrb[0].mxu0
  %v670 = vadd.f32 %v629, %v669
  %v671 = vpop.f32.mrb[0].mxu0
  %v672 = vpop.f32.mrb[0].mxu0
  %v673 = vadd.f32 %v632, %v672
  %v674 = vpop.f32.mrb[0].mxu0
  %675 = vdwg.mxu0
  %676 = vmatprep.subr.bf16.mxu0 0
  %677 = vmatpush1.bf16.msra.mxu0 %v498
  %678 = vmatprep.subr.bf16.mxu0 0
  %679 = vmatpush1.bf16.msra.mxu0 %v499
  %680 = vmatprep.subr.bf16.mxu0 0
  %681 = vmatpush1.bf16.msra.mxu0 %v500
  %682 = vmatprep.subr.bf16.mxu0 0
  %683 = vmatpush1.bf16.msra.mxu0 %v501
  %684 = vmatprep.subr.bf16.mxu0 0
  %685 = vmatpush1.bf16.msra.mxu0 %v502
  %686 = vmatprep.subr.bf16.mxu0 0
  %687 = vmatpush1.bf16.msra.mxu0 %v503
  %688 = vmatprep.subr.bf16.mxu0 0
  %689 = vmatpush1.bf16.msra.mxu0 %v504
  %690 = vmatprep.subr.bf16.mxu0 0
  %691 = vmatpush1.bf16.msra.mxu0 %v505
  %692 = vmatprep.subr.bf16.mxu0 0
  %693 = vmatpush1.bf16.msra.mxu0 %v506
  %694 = vmatprep.subr.bf16.mxu0 0
  %695 = vmatpush1.bf16.msra.mxu0 %v507
  %696 = vmatprep.subr.bf16.mxu0 0
  %697 = vmatpush1.bf16.msra.mxu0 %v508
  %698 = vmatprep.subr.bf16.mxu0 0
  %699 = vmatpush1.bf16.msra.mxu0 %v509
  %700 = vmatprep.subr.bf16.mxu0 0
  %701 = vmatpush1.bf16.msra.mxu0 %v510
  %702 = vmatprep.subr.bf16.mxu0 0
  %703 = vmatpush1.bf16.msra.mxu0 %v511
  %704 = vmatprep.subr.bf16.mxu0 0
  %705 = vmatpush1.bf16.msra.mxu0 %v512
  %706 = vmatprep.subr.bf16.mxu0 0
  %707 = vmatpush1.bf16.msra.mxu0 %v513
  %708 = vmatprep.mubr.bf16.mxu0 %v199
  %709 = vmatmul.mubr.bf16.gmra.mrb[0].mxu0 %v198
  %v710 = vpop.f32.mrb[0].mxu0
  %v711 = vadd.f32 %v670, %v710
  %v712 = vpop.f32.mrb[0].mxu0
  %v713 = vpop.f32.mrb[0].mxu0
  %v714 = vadd.f32 %v673, %v713
  %v715 = vpop.f32.mrb[0].mxu0
  %716 = vdwg.mxu0
  %717 = vmatprep.subr.bf16.mxu0 0
  %718 = vmatpush1.bf16.msra.mxu0 %v514
  %719 = vmatprep.subr.bf16.mxu0 0
  %720 = vmatpush1.bf16.msra.mxu0 %v515
  %721 = vmatprep.subr.bf16.mxu0 0
  %722 = vmatpush1.bf16.msra.mxu0 %v516
  %723 = vmatprep.subr.bf16.mxu0 0
  %724 = vmatpush1.bf16.msra.mxu0 %v517
  %725 = vmatprep.subr.bf16.mxu0 0
  %726 = vmatpush1.bf16.msra.mxu0 %v518
  %727 = vmatprep.subr.bf16.mxu0 0
  %728 = vmatpush1.bf16.msra.mxu0 %v519
  %729 = vmatprep.subr.bf16.mxu0 0
  %730 = vmatpush1.bf16.msra.mxu0 %v520
  %731 = vmatprep.subr.bf16.mxu0 0
  %732 = vmatpush1.bf16.msra.mxu0 %v521
  %733 = vmatprep.subr.bf16.mxu0 0
  %734 = vmatpush1.bf16.msra.mxu0 %v522
  %735 = vmatprep.subr.bf16.mxu0 0
  %736 = vmatpush1.bf16.msra.mxu0 %v523
  %737 = vmatprep.subr.bf16.mxu0 0
  %738 = vmatpush1.bf16.msra.mxu0 %v524
  %739 = vmatprep.subr.bf16.mxu0 0
  %740 = vmatpush1.bf16.msra.mxu0 %v525
  %741 = vmatprep.subr.bf16.mxu0 0
  %742 = vmatpush1.bf16.msra.mxu0 %v526
  %743 = vmatprep.subr.bf16.mxu0 0
  %744 = vmatpush1.bf16.msra.mxu0 %v527
  %745 = vmatprep.subr.bf16.mxu0 0
  %746 = vmatpush1.bf16.msra.mxu0 %v528
  %747 = vmatprep.subr.bf16.mxu0 0
  %748 = vmatpush1.bf16.msra.mxu0 %v529
  %749 = vmatprep.mubr.bf16.mxu0 %v201
  %750 = vmatmul.mubr.bf16.gmra.mrb[0].mxu0 %v200
  %v751 = vpop.f32.mrb[0].mxu0
  %v752 = vadd.f32 %v711, %v751
  %v753 = vpop.f32.mrb[0].mxu0
  %v754 = vpop.f32.mrb[0].mxu0
  %v755 = vadd.f32 %v714, %v754
  %v756 = vpop.f32.mrb[0].mxu0
  %757 = vdwg.mxu0
  %v758 = vmax.f32 %v752, 0.0
  %v759 = vmax.f32 %v755, 0.0
  %v760 = vpack.c.bf16 %v759, %v758
  %v761 = vld [vmem:[%s3] sm:$0xf]
  %v762 = vld [vmem:[%s3 + $0x4] sm:$0xf]
  %v763 = vld [vmem:[%s3 + $0x8] sm:$0xf]
  %v764 = vld [vmem:[%s3 + $0xc] sm:$0xf]
  %v765 = vld [vmem:[%s3 + $0x10] sm:$0xf]
  %v766 = vld [vmem:[%s3 + $0x14] sm:$0xf]
  %v767 = vld [vmem:[%s3 + $0x18] sm:$0xf]
  %v768 = vld [vmem:[%s3 + $0x1c] sm:$0xf]
  %v769 = vld [vmem:[%s3 + $0x20] sm:$0xf]
  %v770 = vld [vmem:[%s3 + $0x24] sm:$0xf]
  %v771 = vld [vmem:[%s3 + $0x28] sm:$0xf]
  %v772 = vld [vmem:[%s3 + $0x2c] sm:$0xf]
  %v773 = vld [vmem:[%s3 + $0x30] sm:$0xf]
  %v774 = vld [vmem:[%s3 + $0x34] sm:$0xf]
  %v775 = vld [vmem:[%s3 + $0x38] sm:$0xf]
  %v776 = vld [vmem:[%s3 + $0x3c] sm:$0xf]
  %v777 = vld [vmem:[%s4] sm:$0x1]
  %v779 = vlaneseq
  %v780 = vshrl.u32 %v779, 7
  %v781 = vsub.s32 0, %v780
  %v782 = vrot.slane %v777, %v781
  %v800 = vunpack.c.l.b16 %v761
  %v801 = vunpack.c.l.b16 %v762
  %v802 = vunpack.c.l.b16 %v763
  %v803 = vunpack.c.l.b16 %v764
  %v804 = vunpack.c.l.b16 %v765
  %v805 = vunpack.c.l.b16 %v766
  %v806 = vunpack.c.l.b16 %v767
  %v807 = vunpack.c.l.b16 %v768
  %v808 = vunpack.c.l.b16 %v769
  %v809 = vunpack.c.l.b16 %v770
  %v810 = vunpack.c.l.b16 %v771
  %v811 = vunpack.c.l.b16 %v772
  %v812 = vunpack.c.l.b16 %v773
  %v813 = vunpack.c.l.b16 %v774
  %v814 = vunpack.c.l.b16 %v775
  %v815 = vunpack.c.l.b16 %v776
  %v816 = vpack.c.b16 %v801, %v800
  %v817 = vpack.c.b16 %v803, %v802
  %v818 = vpack.c.b16 %v805, %v804
  %v819 = vpack.c.b16 %v807, %v806
  %v820 = vpack.c.b16 %v809, %v808
  %v821 = vpack.c.b16 %v811, %v810
  %v822 = vpack.c.b16 %v813, %v812
  %v823 = vpack.c.b16 %v815, %v814
  %832 = vmatprep.subr.bf16.mxu0 0
  %833 = vmatpush1.bf16.msra.mxu0 %v816
  %834 = vmatprep.subr.bf16.mxu0 0
  %835 = vmatpush1.bf16.msra.mxu0 %v817
  %836 = vmatprep.subr.bf16.mxu0 0
  %837 = vmatpush1.bf16.msra.mxu0 %v818
  %838 = vmatprep.subr.bf16.mxu0 0
  %839 = vmatpush1.bf16.msra.mxu0 %v819
  %840 = vmatprep.subr.bf16.mxu0 0
  %841 = vmatpush1.bf16.msra.mxu0 %v820
  %842 = vmatprep.subr.bf16.mxu0 0
  %843 = vmatpush1.bf16.msra.mxu0 %v821
  %844 = vmatprep.subr.bf16.mxu0 0
  %845 = vmatpush1.bf16.msra.mxu0 %v822
  %846 = vmatprep.subr.bf16.mxu0 0
  %847 = vmatpush1.bf16.msra.mxu0 %v823
  %848 = vmatprep.subr.bf16.mxu0 0
  %849 = vmatpush1.bf16.msra.mxu0 0
  %850 = vmatprep.subr.bf16.mxu0 0
  %851 = vmatpush1.bf16.msra.mxu0 0
  %852 = vmatprep.subr.bf16.mxu0 0
  %853 = vmatpush1.bf16.msra.mxu0 0
  %854 = vmatprep.subr.bf16.mxu0 0
  %855 = vmatpush1.bf16.msra.mxu0 0
  %856 = vmatprep.subr.bf16.mxu0 0
  %857 = vmatpush1.bf16.msra.mxu0 0
  %858 = vmatprep.subr.bf16.mxu0 0
  %859 = vmatpush1.bf16.msra.mxu0 0
  %860 = vmatprep.subr.bf16.mxu0 0
  %861 = vmatpush1.bf16.msra.mxu0 0
  %862 = vmatprep.subr.bf16.mxu0 0
  %863 = vmatpush1.bf16.msra.mxu0 0
  %864 = vmatprep.mubr.bf16.mxu0 0
  %865 = vmatmul.mubr.bf16.gmra.mrb[0].mxu0 %v760
  %v866 = vpop.f32.mrb[0].mxu0
  %v867 = vadd.f32 %v782, %v866
  %v868 = vpop.f32.mrb[0].mxu0
  %v869 = vpop.f32.mrb[0].mxu0
  %v870 = vadd.f32 %v782, %v869
  %v871 = vpop.f32.mrb[0].mxu0
  %872 = vdwg.mxu0
  %v873 = vmax.f32 %v867, 0.0
  %v874 = vmax.f32 %v870, 0.0
  %v875 = vpack.c.bf16 %v874, %v873
  %v876 = vld [vmem:[%s5] sm:$0xf]
  %v877 = vld [vmem:[%s5 + $0x4] sm:$0xf]
  %v878 = vld [vmem:[%s5 + $0x8] sm:$0xf]
  %v879 = vld [vmem:[%s5 + $0xc] sm:$0xf]
  %v880 = vld [vmem:[%s5 + $0x10] sm:$0xf]
  %v881 = vld [vmem:[%s5 + $0x14] sm:$0xf]
  %v882 = vld [vmem:[%s5 + $0x18] sm:$0xf]
  %v883 = vld [vmem:[%s5 + $0x1c] sm:$0xf]
  %v884 = vld [vmem:[%s5 + $0x20] sm:$0xf]
  %v885 = vld [vmem:[%s5 + $0x24] sm:$0xf]
  %v886 = vld [vmem:[%s5 + $0x28] sm:$0xf]
  %v887 = vld [vmem:[%s5 + $0x2c] sm:$0xf]
  %v888 = vld [vmem:[%s5 + $0x30] sm:$0xf]
  %v889 = vld [vmem:[%s5 + $0x34] sm:$0xf]
  %v890 = vld [vmem:[%s5 + $0x38] sm:$0xf]
  %v891 = vld [vmem:[%s5 + $0x3c] sm:$0xf]
  %v892 = vld [vmem:[%s6] sm:$0x1]
  %v894 = vlaneseq
  %v895 = vshrl.u32 %v894, 7
  %v896 = vsub.s32 0, %v895
  %v897 = vrot.slane %v892, %v896
  %v915 = vunpack.c.l.b16 %v876
  %v916 = vunpack.c.l.b16 %v877
  %v917 = vunpack.c.l.b16 %v878
  %v918 = vunpack.c.l.b16 %v879
  %v919 = vunpack.c.l.b16 %v880
  %v920 = vunpack.c.l.b16 %v881
  %v921 = vunpack.c.l.b16 %v882
  %v922 = vunpack.c.l.b16 %v883
  %v923 = vunpack.c.l.b16 %v884
  %v924 = vunpack.c.l.b16 %v885
  %v925 = vunpack.c.l.b16 %v886
  %v926 = vunpack.c.l.b16 %v887
  %v927 = vunpack.c.l.b16 %v888
  %v928 = vunpack.c.l.b16 %v889
  %v929 = vunpack.c.l.b16 %v890
  %v930 = vunpack.c.l.b16 %v891
  %v931 = vpack.c.b16 %v916, %v915
  %v932 = vpack.c.b16 %v918, %v917
  %v933 = vpack.c.b16 %v920, %v919
  %v934 = vpack.c.b16 %v922, %v921
  %v935 = vpack.c.b16 %v924, %v923
  %v936 = vpack.c.b16 %v926, %v925
  %v937 = vpack.c.b16 %v928, %v927
  %v938 = vpack.c.b16 %v930, %v929
  %947 = vmatprep.subr.bf16.mxu0 0
  %948 = vmatpush1.bf16.msra.mxu0 %v931
  %949 = vmatprep.subr.bf16.mxu0 0
  %950 = vmatpush1.bf16.msra.mxu0 %v932
  %951 = vmatprep.subr.bf16.mxu0 0
  %952 = vmatpush1.bf16.msra.mxu0 %v933
  %953 = vmatprep.subr.bf16.mxu0 0
  %954 = vmatpush1.bf16.msra.mxu0 %v934
  %955 = vmatprep.subr.bf16.mxu0 0
  %956 = vmatpush1.bf16.msra.mxu0 %v935
  %957 = vmatprep.subr.bf16.mxu0 0
  %958 = vmatpush1.bf16.msra.mxu0 %v936
  %959 = vmatprep.subr.bf16.mxu0 0
  %960 = vmatpush1.bf16.msra.mxu0 %v937
  %961 = vmatprep.subr.bf16.mxu0 0
  %962 = vmatpush1.bf16.msra.mxu0 %v938
  %963 = vmatprep.subr.bf16.mxu0 0
  %964 = vmatpush1.bf16.msra.mxu0 0
  %965 = vmatprep.subr.bf16.mxu0 0
  %966 = vmatpush1.bf16.msra.mxu0 0
  %967 = vmatprep.subr.bf16.mxu0 0
  %968 = vmatpush1.bf16.msra.mxu0 0
  %969 = vmatprep.subr.bf16.mxu0 0
  %970 = vmatpush1.bf16.msra.mxu0 0
  %971 = vmatprep.subr.bf16.mxu0 0
  %972 = vmatpush1.bf16.msra.mxu0 0
  %973 = vmatprep.subr.bf16.mxu0 0
  %974 = vmatpush1.bf16.msra.mxu0 0
  %975 = vmatprep.subr.bf16.mxu0 0
  %976 = vmatpush1.bf16.msra.mxu0 0
  %977 = vmatprep.subr.bf16.mxu0 0
  %978 = vmatpush1.bf16.msra.mxu0 0
  %979 = vmatprep.mubr.bf16.mxu0 0
  %980 = vmatmul.mubr.bf16.gmra.mrb[0].mxu0 %v875
  %v981 = vpop.f32.mrb[0].mxu0
  %v982 = vadd.f32 %v897, %v981
  %v983 = vpop.f32.mrb[0].mxu0
  %v984 = vpop.f32.mrb[0].mxu0
  %v985 = vadd.f32 %v897, %v984
  %v986 = vpop.f32.mrb[0].mxu0
  %987 = vdwg.mxu0
  %988 = vst [vmem:[%s7] sm:$0xff] %v982
  %989 = vst [vmem:[%s7 + $0x8] sm:$0xff] %v985
  // Predicated region
  $region30: #{continual_model_forward.1} parent=0 // pred_check
    _
  $region31: #{continual_model_forward.1} parent=0 // pred_check_branch
    %991 = sbr.rel (0) target = $region33
  $region32: #{continual_model_forward.1} parent=0 // pred_region
    _
  $region33: #{continual_model_forward.1} parent=0 // pred_fallthru
    _
  // Predicated region
  $region34: #{continual_model_forward.1} parent=0 // pred_check
    _
  $region35: #{continual_model_forward.1} parent=0 // pred_check_branch
    %993 = sbr.rel (0) target = $region37
  $region36: #{continual_model_forward.1} parent=0 // pred_region
    _
  $region37: #{continual_model_forward.1} parent=0 // pred_fallthru
    _

</llo_original>
